<compile_context>
chip_gen: v7x
topology: tpu7x:2x2x1
jax: 0.10.0
libtpu: 0.0.40
codegen_flags: <defaults>
</compile_context>

<pallas_src>
import functools

import numpy as np

import jax
import jax.numpy as jnp
from jax.experimental import pallas as pl
from jax.experimental.pallas import tpu as pltpu


# ---------------------------------------------------------------------------
# Placeholder Pallas kernel: tiled, pipelined pass-through (memcpy at roofline)
# ---------------------------------------------------------------------------

_LANE = 128
_SUBLANE = 8
# Cap per-tile bytes so 4 double-buffered tiles (2 in + 2 out) stay far below
# the smallest default scoped-VMEM budget (v5e: 16 MiB).
_MAX_TILE_BYTES = 2 * 1024 * 1024


def _identity_kernel(x_ref, o_ref):
    # Pass-through: copy the VMEM tile to the (aliased) output tile.
    o_ref[...] = x_ref[...]


def _choose_layout(n: int, itemsize: int):
    """Pick (padded_rows, lane_width, tile_rows) for a flat length `n`.

    - lane width L: largest multiple of 128 (capped at 2048) that divides the
      128-padded length while keeping >= 8 rows (falls back to 128);
    - rows padded to a multiple of tile_rows;
    - tile_rows: multiple of 8, tile bytes <= _MAX_TILE_BYTES.
    All values are Python ints (static at trace time).
    """
    n_pad = ((n + _LANE - 1) // _LANE) * _LANE
    lane = _LANE
    for cand in (2048, 1024, 512, 256, 128):
        if n_pad % cand == 0 and n_pad // cand >= _SUBLANE:
            lane = cand
            break
    rows = n_pad // lane
    rows = ((rows + _SUBLANE - 1) // _SUBLANE) * _SUBLANE  # multiple of 8

    max_tile_rows = max(_SUBLANE,
                        (_MAX_TILE_BYTES // (lane * itemsize)) // _SUBLANE * _SUBLANE)
    tile_rows = min(rows, max_tile_rows)
    # Round rows up so tile_rows divides evenly (keeps every store unmasked).
    rows = ((rows + tile_rows - 1) // tile_rows) * tile_rows
    return rows, lane, tile_rows


def _pallas_identity_2d(x2d: jnp.ndarray, tile_rows: int) -> jnp.ndarray:
    """Row-tiled, double-buffered identity over a lane-dense (R, L) slab."""
    rows, lane = x2d.shape
    itemsize = jnp.dtype(x2d.dtype).itemsize
    grid_r = rows // tile_rows

    return pl.pallas_call(
        _identity_kernel,
        out_shape=jax.ShapeDtypeStruct((rows, lane), x2d.dtype),
        grid=(grid_r,),
        in_specs=[pl.BlockSpec((tile_rows, lane), lambda i: (i, 0))],
        out_specs=pl.BlockSpec((tile_rows, lane), lambda i: (i, 0)),
        # Output aliases the input buffer: no second HBM allocation for a
        # pure memcpy placeholder (x2d is an intermediate inside the jitted
        # wrapper, so donation is safe).
        input_output_aliases={0: 0},
        compiler_params=pltpu.CompilerParams(
            dimension_semantics=("parallel",),  # shard rows across TCs on v7x
        ),
        cost_estimate=pl.CostEstimate(
            flops=0,
            transcendentals=0,
            bytes_accessed=2 * rows * lane * itemsize,
        ),
    )(x2d)


@jax.jit
def pallas_passthrough(x: jnp.ndarray) -> jnp.ndarray:
    """Flatten any tensor into a lane-dense (rows, L) slab (padding as
    needed), run the tiled identity kernel, and restore the original shape.

    The reshape/pad live inside the jitted wrapper; the kernel itself sees an
    evenly tiled, lane-dense slab so every store is a full-width vst.
    """
    orig_shape = x.shape
    n = int(np.prod(orig_shape)) if orig_shape else 1
    itemsize = jnp.dtype(x.dtype).itemsize
    rows, lane, tile_rows = _choose_layout(n, itemsize)

    x_flat = x.reshape(-1)
    pad = rows * lane - n
    if pad:
        x_flat = jnp.pad(x_flat, (0, pad))
    x2d = x_flat.reshape(rows, lane)

    y2d = _pallas_identity_2d(x2d, tile_rows)

    y_flat = y2d.reshape(-1)
    if pad:
        y_flat = y_flat[:n]
    return y_flat.reshape(orig_shape)


# ---------------------------------------------------------------------------
# Faithful mirror of the (empty) PyTorch `resnet` module
# ---------------------------------------------------------------------------

class ResnetPallas:
    """Mirror of the (empty) PyTorch `resnet` module."""

    def __init__(self):
        # Reference __init__ defines no parameters; nothing to initialize.
        pass

    def forward(self):
        # Reference forward() takes no inputs, does no compute, returns None.
        # Per the review: for a no-op / pure-identity path we launch no kernel
        # at all (zero HBM traffic, zero launch overhead).
        return None


def resnet_forward():
    return ResnetPallas().forward()


if __name__ == "__main__":
    # Faithful call: empty forward, returns None (matches PyTorch module).
    out = resnet_forward()
    assert out is None

    # Exercise the Pallas placeholder kernel on a deterministic small input
    # shaped like what an RGB backbone would receive: NCHW (2, 4, 16, 16).
    key = jax.random.PRNGKey(0)
    x_nchw = jax.random.normal(key, (2, 4, 16, 16), dtype=jnp.float32)

    # Snapshot the reference on host before the (aliased) kernel call.
    x_ref_np = np.asarray(jax.device_get(x_nchw))

    y = pallas_passthrough(x_nchw)
    y = jax.block_until_ready(y)

    # Correctness check of the placeholder kernel (exact identity).
    y_np = np.asarray(jax.device_get(y))
    assert y_np.shape == x_ref_np.shape
    assert np.array_equal(y_np, x_ref_np), "identity kernel mismatch"

    print("KERNEL_OK")
</pallas_src>

<mosaic_0001>
module attributes {stable_mosaic.version = 11 : i64} {
  func.func @_identity_kernel(%arg0: i32, %arg1: memref<8x256xf32, #tpu.memory_space<vmem>>, %arg2: memref<8x256xf32, #tpu.memory_space<vmem>>) attributes {dimension_semantics = [#tpu.dimension_semantics<parallel>], iteration_bounds = array<i64: 1>, scalar_prefetch = 0 : i64, scratch_operands = 0 : i64, tpu.core_type = #tpu.core_type<tc>, window_params = [{transform_indices = @transform_0, window_bounds = array<i64: 8, 256>}, {transform_indices = @transform_1, window_bounds = array<i64: 8, 256>}]} {
    %c0 = arith.constant 0 : index
    %c0_0 = arith.constant 0 : index
    %0 = vector.load %arg1[%c0, %c0_0] : memref<8x256xf32, #tpu.memory_space<vmem>>, vector<8x256xf32>
    %c0_1 = arith.constant 0 : index
    %c0_2 = arith.constant 0 : index
    %1 = vector.load %arg2[%c0_1, %c0_2] : memref<8x256xf32, #tpu.memory_space<vmem>>, vector<8x256xf32>
    tpu.vector_store %arg2[%c0_1, %c0_2], %0 {strides = array<i32>} : memref<8x256xf32, #tpu.memory_space<vmem>>, vector<8x256xf32>,
    return
  }
  func.func @transform_0(%arg0: i32) -> (i32, i32) {
    %c0_i32 = arith.constant 0 : i32
    %c0_i32_0 = arith.constant 0 : i32
    return %arg0, %c0_i32 : i32, i32
  }
  func.func @transform_1(%arg0: i32) -> (i32, i32) {
    %c0_i32 = arith.constant 0 : i32
    %c0_i32_0 = arith.constant 0 : i32
    return %arg0, %c0_i32 : i32, i32
  }
}

</mosaic_0001>

<llo_original>
// kernel: pallas_passthrough.1
$region0: #{pallas_passthrough.1}
  #allocation0 [shape = 'u32[]', space=smem, size = 0x4, offset = 0x4, fixed_abs, tag = 'smem constant byte address 0x4 - core index']
  #allocation1 [shape = 'u32[144,128]{1,0:T(1,128)}', space=vmem, size = 0x12000, scoped, tag = 'internal scratch']
  %s0 = inlined_call_operand.vmem [shape: f32[8,256], index: 0, kind: input, shape index: {}, may-alias: {0,1}]
  %s1 = inlined_call_operand.vmem [shape: f32[8,256], index: 1, kind: output, shape index: {}, may-alias: {0,1}]
  %s2 = sld [smem:[#allocation0]]
  $region14: #{pallas_passthrough.1} parent=0
    _
  %s4 = ssub.s32 1, %s2
  %s5 = scalar_select 0, %s4, %s2
  // Predicated region
  $region2: #{pallas_passthrough.1} parent=0 // pred_check
    _
  $region3: #{pallas_passthrough.1} parent=0 // pred_check_branch
    %7 = sbr.rel (0) target = $region5
  $region4: #{pallas_passthrough.1} parent=0 // pred_region
    _
  $region5: #{pallas_passthrough.1} parent=0 // pred_fallthru
    _
  %v8 = vld [vmem:[%s0] sm:$0xff]
  %v9 = vld [vmem:[%s0 + $0x8] sm:$0xff]
  %10 = vst [vmem:[%s1] sm:$0xff] %v8
  %11 = vst [vmem:[%s1 + $0x8] sm:$0xff] %v9
  // Predicated region
  $region6: #{pallas_passthrough.1} parent=0 // pred_check
    _
  $region7: #{pallas_passthrough.1} parent=0 // pred_check_branch
    %13 = sbr.rel (0) target = $region9
  $region8: #{pallas_passthrough.1} parent=0 // pred_region
    _
  $region9: #{pallas_passthrough.1} parent=0 // pred_fallthru
    _
  // Predicated region
  $region10: #{pallas_passthrough.1} parent=0 // pred_check
    _
  $region11: #{pallas_passthrough.1} parent=0 // pred_check_branch
    %15 = sbr.rel (0) target = $region13
  $region12: #{pallas_passthrough.1} parent=0 // pred_region
    _
  $region13: #{pallas_passthrough.1} parent=0 // pred_fallthru
    _

</llo_original>
